<compile_context>
chip_gen: v7x
topology: tpu7x:2x2x1
jax: 0.10.0
libtpu: 0.0.40
codegen_flags: <defaults>
</compile_context>

<pallas_src>
import jax
import jax.numpy as jnp
from jax.experimental import pallas as pl
from jax.experimental.pallas import tpu as pltpu


def _model_kernel(x_ref, w1_ref, b1_ref, w2_ref, b2_ref, o_ref):
    # encoder: Linear + ReLU  (bf16 MXU operands, f32 accumulation)
    h = jnp.dot(x_ref[...], w1_ref[...], preferred_element_type=jnp.float32)
    h = jnp.maximum(h + b1_ref[...], 0.0)                 # bias-add / ReLU in f32
    # head: Linear — single downcast of activations to the MXU operand dtype
    y = jnp.dot(h.astype(w2_ref.dtype), w2_ref[...],
                preferred_element_type=jnp.float32)
    o_ref[...] = (y + b2_ref[...]).astype(o_ref.dtype)


def _round_up(n, m):
    return ((n + m - 1) // m) * m


def _pad_axis(a, target, axis):
    pad = target - a.shape[axis]
    if pad == 0:
        return a
    widths = [(0, 0)] * a.ndim
    widths[axis] = (0, pad)
    return jnp.pad(a, widths)


def model_forward(x, w1, b1, w2, b2, *, tb=256, pad_out=False,
                  mxu_dtype=jnp.bfloat16):
    B, D_IN = x.shape
    D_HID = w1.shape[1]
    D_OUT = w2.shape[1]
    out_dtype = x.dtype

    # ---- tiling decisions ---------------------------------------------------
    # Hidden dim lane-dense (multiple of 128): the pad cost lands only on the
    # VMEM-resident weights (amortized over the whole batch) and keeps both
    # matmuls with full MXU columns / lane-dense K.  Zero padding is exact:
    # padded hidden columns see zero weights + zero bias, ReLU(0)=0, and the
    # corresponding w2 rows are zero.
    D_HID_P = _round_up(D_HID, 128)
    # x stays unpadded along D_IN (extra HBM pass + 4x DMA avoided); D_OUT
    # padding is a knob: lane-dense store (helps v5e) vs 8x writeback bytes
    # for small heads (default off).
    D_OUT_P = _round_up(D_OUT, 128) if pad_out else D_OUT

    B_8 = _round_up(B, 8)                      # only sublane-align the batch
    # Batch tile: multiple of 8, capped so that
    #   * >= 2 grid steps exist when possible (keeps both v7x TensorCores busy),
    #   * the f32 intermediate (TB, D_HID_P) stays <= ~2 MiB (no spill blowup).
    two_steps = _round_up(pl.cdiv(B_8, 2), 8)
    h_cap = max(8, ((2 * 1024 * 1024) // (4 * D_HID_P)) // 8 * 8)
    TB = max(8, min(tb, B_8, two_steps, h_cap))
    grid = (pl.cdiv(B_8, TB),)                 # ragged last tile handled by Pallas

    # ---- operand prep (pad only where needed, cast MXU operands to bf16) ----
    x_p = _pad_axis(x, B_8, 0).astype(mxu_dtype)
    w1_p = _pad_axis(w1, D_HID_P, 1).astype(mxu_dtype)
    b1_p = _pad_axis(b1.reshape(1, -1), D_HID_P, 1).astype(jnp.float32)
    w2_p = _pad_axis(_pad_axis(w2, D_HID_P, 0), D_OUT_P, 1).astype(mxu_dtype)
    b2_p = _pad_axis(b2.reshape(1, -1), D_OUT_P, 1).astype(jnp.float32)

    # ---- VMEM budget + cost estimate from actual post-cast shapes/dtypes ----
    bpe_x = jnp.dtype(mxu_dtype).itemsize
    bpe_o = jnp.dtype(out_dtype).itemsize
    buf_bytes = (
        2 * TB * D_IN * bpe_x                            # double-buffered x tile
        + 2 * TB * D_OUT_P * bpe_o                       # double-buffered out tile
        + (D_IN * D_HID_P + D_HID_P * D_OUT_P) * bpe_x   # single-buffered weights
        + (D_HID_P + D_OUT_P) * 4                        # single-buffered biases
        + TB * D_HID_P * 4                               # f32 hidden intermediate
    )
    vmem_limit = int(min(48 * 1024 * 1024, buf_bytes + 16 * 1024 * 1024))

    flops = 2 * B_8 * (D_IN * D_HID_P + D_HID_P * D_OUT_P)
    bytes_accessed = (
        B_8 * D_IN * bpe_x + D_IN * D_HID_P * bpe_x + D_HID_P * 4
        + D_HID_P * D_OUT_P * bpe_x + D_OUT_P * 4 + B_8 * D_OUT_P * bpe_o
    )

    # Weights / biases never change block index -> keep a single VMEM buffer.
    resident = dict(pipeline_mode=pl.Buffered(1))

    out_p = pl.pallas_call(
        _model_kernel,
        out_shape=jax.ShapeDtypeStruct((B_8, D_OUT_P), out_dtype),
        grid_spec=pltpu.PrefetchScalarGridSpec(
            num_scalar_prefetch=0,
            grid=grid,
            in_specs=[
                # Batch-streamed input tile (double-buffered by the pipeline).
                pl.BlockSpec((TB, D_IN), lambda i: (i, 0)),
                # VMEM-resident parameters (constant index_map, single buffer).
                pl.BlockSpec((D_IN, D_HID_P), lambda i: (0, 0), **resident),
                pl.BlockSpec((1, D_HID_P), lambda i: (0, 0), **resident),
                pl.BlockSpec((D_HID_P, D_OUT_P), lambda i: (0, 0), **resident),
                pl.BlockSpec((1, D_OUT_P), lambda i: (0, 0), **resident),
            ],
            out_specs=pl.BlockSpec((TB, D_OUT_P), lambda i: (i, 0)),
        ),
        compiler_params=pltpu.CompilerParams(
            dimension_semantics=("parallel",),           # megacore sharding on v7x
            vmem_limit_bytes=vmem_limit,
        ),
        cost_estimate=pl.CostEstimate(
            flops=flops, transcendentals=0, bytes_accessed=bytes_accessed),
    )(x_p, w1_p, b1_p, w2_p, b2_p)

    # Slice back to the logical (unpadded) output.
    return out_p[:B, :D_OUT]

# TODO(synk): Model.feature(x) = head.feature(encoder(x)) depends on the concrete
# head implementation and is not part of forward(); only the forward hot path is fused.


if __name__ == "__main__":
    B, D_IN, D_HID, D_OUT = 24, 32, 64, 16

    key = jax.random.PRNGKey(0)
    kx, k1, kb1, k2, kb2 = jax.random.split(key, 5)

    x = jax.random.normal(kx, (B, D_IN), dtype=jnp.float32)
    w1 = jax.random.uniform(k1, (D_IN, D_HID), jnp.float32, -1.0, 1.0) / jnp.sqrt(D_IN)
    b1 = jax.random.uniform(kb1, (D_HID,), jnp.float32, -1.0, 1.0) / jnp.sqrt(D_IN)
    w2 = jax.random.uniform(k2, (D_HID, D_OUT), jnp.float32, -1.0, 1.0) / jnp.sqrt(D_HID)
    b2 = jax.random.uniform(kb2, (D_OUT,), jnp.float32, -1.0, 1.0) / jnp.sqrt(D_HID)

    out = model_forward(x, w1, b1, w2, b2)
    out = jax.block_until_ready(out)
    assert out.shape == (B, D_OUT)

    # Reference mirroring the kernel numerics (bf16 MXU operands, f32 accumulate).
    xb, w1b, w2b = (a.astype(jnp.bfloat16) for a in (x, w1, w2))
    h_ref = jnp.maximum(
        jnp.dot(xb, w1b, preferred_element_type=jnp.float32) + b1, 0.0)
    ref_bf16 = jnp.dot(h_ref.astype(jnp.bfloat16), w2b,
                       preferred_element_type=jnp.float32) + b2
    assert jnp.allclose(out, ref_bf16, atol=1e-3, rtol=1e-3)

    # Full-precision PyTorch-semantics reference (loose tolerance for bf16 operands).
    ref_f32 = jnp.maximum(x @ w1 + b1, 0.0) @ w2 + b2
    assert jnp.allclose(out, ref_f32, atol=5e-2, rtol=5e-2)

    print("KERNEL_OK")
</pallas_src>

<mosaic_0001>
module attributes {stable_mosaic.version = 11 : i64} {
  func.func @_model_kernel(%arg0: i32, %arg1: memref<16x32xbf16, #tpu.memory_space<vmem>>, %arg2: memref<32x128xbf16, #tpu.memory_space<vmem>>, %arg3: memref<1x128xf32, #tpu.memory_space<vmem>>, %arg4: memref<128x16xbf16, #tpu.memory_space<vmem>>, %arg5: memref<1x16xf32, #tpu.memory_space<vmem>>, %arg6: memref<16x16xf32, #tpu.memory_space<vmem>>) attributes {dimension_semantics = [#tpu.dimension_semantics<parallel>], iteration_bounds = array<i64: 2>, scalar_prefetch = 0 : i64, scratch_operands = 0 : i64, tpu.core_type = #tpu.core_type<tc>, window_params = [{transform_indices = @transform_0, window_bounds = array<i64: 16, 32>}, {pipeline_mode = #tpu.pipeline_mode<synchronous>, transform_indices = @transform_1, window_bounds = array<i64: 32, 128>}, {pipeline_mode = #tpu.pipeline_mode<synchronous>, transform_indices = @transform_2, window_bounds = array<i64: 1, 128>}, {pipeline_mode = #tpu.pipeline_mode<synchronous>, transform_indices = @transform_3, window_bounds = array<i64: 128, 16>}, {pipeline_mode = #tpu.pipeline_mode<synchronous>, transform_indices = @transform_4, window_bounds = array<i64: 1, 16>}, {transform_indices = @transform_5, window_bounds = array<i64: 16, 16>}]} {
    %c0 = arith.constant 0 : index
    %c0_0 = arith.constant 0 : index
    %0 = vector.load %arg1[%c0, %c0_0] : memref<16x32xbf16, #tpu.memory_space<vmem>>, vector<16x32xbf16>
    %c0_1 = arith.constant 0 : index
    %c0_2 = arith.constant 0 : index
    %1 = vector.load %arg2[%c0_1, %c0_2] : memref<32x128xbf16, #tpu.memory_space<vmem>>, vector<32x128xbf16>
    %cst = arith.constant dense<0.000000e+00> : vector<16x128xf32>
    %2 = tpu.matmul %0, %1, %cst {dimension_numbers = #tpu.dot_dimension_numbers<[1], [0], [0], [1], [0, 0, 1, 1], [], []>} : vector<16x32xbf16>, vector<32x128xbf16>, vector<16x128xf32> -> vector<16x128xf32>
    %c0_3 = arith.constant 0 : index
    %c0_4 = arith.constant 0 : index
    %3 = vector.load %arg3[%c0_3, %c0_4] : memref<1x128xf32, #tpu.memory_space<vmem>>, vector<1x128xf32>
    %4 = vector.broadcast %3 : vector<1x128xf32> to vector<16x128xf32>
    %5 = arith.addf %2, %4 : vector<16x128xf32>
    %cst_5 = arith.constant 0.000000e+00 : f32
    %6 = vector.broadcast %cst_5 : f32 to vector<16x128xf32>
    %7 = arith.maximumf %5, %6 : vector<16x128xf32>
    %8 = arith.truncf %7 : vector<16x128xf32> to vector<16x128xbf16>
    %c0_6 = arith.constant 0 : index
    %c0_7 = arith.constant 0 : index
    %9 = vector.load %arg4[%c0_6, %c0_7] : memref<128x16xbf16, #tpu.memory_space<vmem>>, vector<128x16xbf16>
    %cst_8 = arith.constant dense<0.000000e+00> : vector<16x16xf32>
    %10 = tpu.matmul %8, %9, %cst_8 {dimension_numbers = #tpu.dot_dimension_numbers<[1], [0], [0], [1], [0, 0, 1, 1], [], []>} : vector<16x128xbf16>, vector<128x16xbf16>, vector<16x16xf32> -> vector<16x16xf32>
    %c0_9 = arith.constant 0 : index
    %c0_10 = arith.constant 0 : index
    %11 = vector.load %arg5[%c0_9, %c0_10] : memref<1x16xf32, #tpu.memory_space<vmem>>, vector<1x16xf32>
    %12 = vector.broadcast %11 : vector<1x16xf32> to vector<16x16xf32>
    %13 = arith.addf %10, %12 : vector<16x16xf32>
    %c0_11 = arith.constant 0 : index
    %c0_12 = arith.constant 0 : index
    %14 = vector.load %arg6[%c0_11, %c0_12] : memref<16x16xf32, #tpu.memory_space<vmem>>, vector<16x16xf32>
    tpu.vector_store %arg6[%c0_11, %c0_12], %13 {strides = array<i32>} : memref<16x16xf32, #tpu.memory_space<vmem>>, vector<16x16xf32>,
    return
  }
  func.func @transform_0(%arg0: i32) -> (i32, i32) {
    %c0_i32 = arith.constant 0 : i32
    %c0_i32_0 = arith.constant 0 : i32
    return %arg0, %c0_i32 : i32, i32
  }
  func.func @transform_1(%arg0: i32) -> (i32, i32) {
    %c0_i32 = arith.constant 0 : i32
    %c0_i32_0 = arith.constant 0 : i32
    %c0_i32_1 = arith.constant 0 : i32
    return %c0_i32, %c0_i32_0 : i32, i32
  }
  func.func @transform_2(%arg0: i32) -> (i32, i32) {
    %c0_i32 = arith.constant 0 : i32
    %c0_i32_0 = arith.constant 0 : i32
    %c0_i32_1 = arith.constant 0 : i32
    return %c0_i32, %c0_i32_0 : i32, i32
  }
  func.func @transform_3(%arg0: i32) -> (i32, i32) {
    %c0_i32 = arith.constant 0 : i32
    %c0_i32_0 = arith.constant 0 : i32
    %c0_i32_1 = arith.constant 0 : i32
    return %c0_i32, %c0_i32_0 : i32, i32
  }
  func.func @transform_4(%arg0: i32) -> (i32, i32) {
    %c0_i32 = arith.constant 0 : i32
    %c0_i32_0 = arith.constant 0 : i32
    %c0_i32_1 = arith.constant 0 : i32
    return %c0_i32, %c0_i32_0 : i32, i32
  }
  func.func @transform_5(%arg0: i32) -> (i32, i32) {
    %c0_i32 = arith.constant 0 : i32
    %c0_i32_0 = arith.constant 0 : i32
    return %arg0, %c0_i32 : i32, i32
  }
}

</mosaic_0001>

<llo_original>
// kernel: tpu_custom_call.1
$region0: #{tpu_custom_call.1}
  #allocation0 [shape = 'u32[]', space=smem, size = 0x4, offset = 0x4, fixed_abs, tag = 'smem constant byte address 0x4 - core index']
  #allocation1 [shape = 'u32[144,128]{1,0:T(1,128)}', space=vmem, size = 0x12000, scoped, tag = 'internal scratch']
  %s0 = inlined_call_operand.vmem [shape: bf16[24,32], index: 0, kind: input, shape index: {}]
  %s1 = inlined_call_operand.vmem [shape: bf16[32,128], index: 1, kind: input, shape index: {}]
  %s2 = inlined_call_operand.vmem [shape: f32[1,128], index: 2, kind: input, shape index: {}]
  %s3 = inlined_call_operand.vmem [shape: bf16[128,16], index: 3, kind: input, shape index: {}]
  %s4 = inlined_call_operand.vmem [shape: f32[1,16], index: 4, kind: input, shape index: {}]
  %s5 = inlined_call_operand.vmem [shape: f32[24,16], index: 5, kind: output, shape index: {}]
  %s6 = sld [smem:[#allocation0]]
  $region101: #{tpu_custom_call.1} parent=0
    _
  %s8 = ssub.s32 1, %s6
  %s9 = scalar_select 0, %s8, %s6
  $region1: #{tpu_custom_call.1} parent=0
    #allocation2 [shape = 'u8[16384]{0}', space=vmem, size = 0x4000, scoped, tag = 'output window, operand 0']
    loop: start=0, step=1, limit=4
    $region2: #{tpu_custom_call.1} parent=1 // loop_pre_header
      _
    $region3: #{tpu_custom_call.1} parent=1 // loop_header
      %s11 = sphi 0, %s15
      %p12 = scmp.ge.s32.totalorder %s11, 4
      %s21 = sphi 0, %s23
      %s24 = sphi 0, %s21
      %s25 = sphi 0, %s24
      %s41 = sphi 0, %s25
      %s45 = sphi 0, %s45
      %s47 = sphi 0, %s45
      %s48 = sphi 0, %s47
      %s62 = sphi 0, %s48
      %s66 = sphi 0, %s66
      %s68 = sphi 0, %s66
      %s69 = sphi 0, %s68
      %s83 = sphi 0, %s69
      %s87 = sphi 0, %s87
      %s89 = sphi 0, %s87
      %s90 = sphi 0, %s89
      %s104 = sphi 0, %s90
      %s108 = sphi 0, %s108
      %s110 = sphi 0, %s108
      %s111 = sphi 0, %s110
      %s125 = sphi 0, %s111
      %s131 = sphi 0, %s133
      %s134 = sphi 0, %s131
      %s135 = sphi 0, %s134
      %s151 = sphi 0, %s135
    $region4: #{tpu_custom_call.1} parent=1 // loop_header_branch
      %14 = sbr.rel (%p12) target = $region8
    $region5: #{tpu_custom_call.1} parent=1 // loop_body
      %s16 = ssub.s32 %s11, 1
      %s17 = ssub.s32 %s11, 2
      %s18 = sadd.s32 %s11, 1
      %s19 = ssub.s32 %s11, %s18
      %p20 = scmp.eq.s32.totalorder %s19, 0
      %s22 = sadd.s32 %s21, 1
      %s23 = scalar_select %p20, %s21, %s22
      %p26 = pneg %p20
      %p27 = scmp.eq.s32.totalorder %s11, 1
      %p28 = por %p26, %p27
      %p29 = scmp.ne.s32.totalorder %s21, %s24
      %p30 = scmp.eq.s32.totalorder %s11, 0
      %p31 = por %p29, %p30
      %p32 = scmp.ne.s32.totalorder %s21, %s24
      %p33 = scmp.eq.s32.totalorder %s16, 1
      %p34 = por %p32, %p33
      %p35 = scmp.ne.s32.totalorder %s24, %s25
      %p36 = scmp.eq.s32.totalorder %s16, 0
      %p37 = por %p35, %p36
      %p38 = scmp.ne.s32.totalorder %s24, %s25
      %p39 = scmp.eq.s32.totalorder %s17, 1
      %p40 = por %p38, %p39
      %p42 = scmp.ne.s32.totalorder %s25, %s41
      %p43 = scmp.eq.s32.totalorder %s17, 0
      %p44 = por %p42, %p43
      %s46 = sadd.s32 %s45, 1
      %p49 = scmp.eq.s32.totalorder %s11, 1
      %p50 = scmp.ne.s32.totalorder %s45, %s47
      %p51 = scmp.eq.s32.totalorder %s11, 0
      %p52 = por %p50, %p51
      %p53 = scmp.ne.s32.totalorder %s45, %s47
      %p54 = scmp.eq.s32.totalorder %s16, 1
      %p55 = por %p53, %p54
      %p56 = scmp.ne.s32.totalorder %s47, %s48
      %p57 = scmp.eq.s32.totalorder %s16, 0
      %p58 = por %p56, %p57
      %p59 = scmp.ne.s32.totalorder %s47, %s48
      %p60 = scmp.eq.s32.totalorder %s17, 1
      %p61 = por %p59, %p60
      %p63 = scmp.ne.s32.totalorder %s48, %s62
      %p64 = scmp.eq.s32.totalorder %s17, 0
      %p65 = por %p63, %p64
      %s67 = sadd.s32 %s66, 1
      %p70 = scmp.eq.s32.totalorder %s11, 1
      %p71 = scmp.ne.s32.totalorder %s66, %s68
      %p72 = scmp.eq.s32.totalorder %s11, 0
      %p73 = por %p71, %p72
      %p74 = scmp.ne.s32.totalorder %s66, %s68
      %p75 = scmp.eq.s32.totalorder %s16, 1
      %p76 = por %p74, %p75
      %p77 = scmp.ne.s32.totalorder %s68, %s69
      %p78 = scmp.eq.s32.totalorder %s16, 0
      %p79 = por %p77, %p78
      %p80 = scmp.ne.s32.totalorder %s68, %s69
      %p81 = scmp.eq.s32.totalorder %s17, 1
      %p82 = por %p80, %p81
      %p84 = scmp.ne.s32.totalorder %s69, %s83
      %p85 = scmp.eq.s32.totalorder %s17, 0
      %p86 = por %p84, %p85
      %s88 = sadd.s32 %s87, 1
      %p91 = scmp.eq.s32.totalorder %s11, 1
      %p92 = scmp.ne.s32.totalorder %s87, %s89
      %p93 = scmp.eq.s32.totalorder %s11, 0
      %p94 = por %p92, %p93
      %p95 = scmp.ne.s32.totalorder %s87, %s89
      %p96 = scmp.eq.s32.totalorder %s16, 1
      %p97 = por %p95, %p96
      %p98 = scmp.ne.s32.totalorder %s89, %s90
      %p99 = scmp.eq.s32.totalorder %s16, 0
      %p100 = por %p98, %p99
      %p101 = scmp.ne.s32.totalorder %s89, %s90
      %p102 = scmp.eq.s32.totalorder %s17, 1
      %p103 = por %p101, %p102
      %p105 = scmp.ne.s32.totalorder %s90, %s104
      %p106 = scmp.eq.s32.totalorder %s17, 0
      %p107 = por %p105, %p106
      %s109 = sadd.s32 %s108, 1
      %p112 = scmp.eq.s32.totalorder %s11, 1
      %p113 = scmp.ne.s32.totalorder %s108, %s110
      %p114 = scmp.eq.s32.totalorder %s11, 0
      %p115 = por %p113, %p114
      %p116 = scmp.ne.s32.totalorder %s108, %s110
      %p117 = scmp.eq.s32.totalorder %s16, 1
      %p118 = por %p116, %p117
      %p119 = scmp.ne.s32.totalorder %s110, %s111
      %p120 = scmp.eq.s32.totalorder %s16, 0
      %p121 = por %p119, %p120
      %p122 = scmp.ne.s32.totalorder %s110, %s111
      %p123 = scmp.eq.s32.totalorder %s17, 1
      %p124 = por %p122, %p123
      %p126 = scmp.ne.s32.totalorder %s111, %s125
      %p127 = scmp.eq.s32.totalorder %s17, 0
      %p128 = por %p126, %p127
      %s129 = ssub.s32 %s11, %s18
      %p130 = scmp.eq.s32.totalorder %s129, 0
      %s132 = sadd.s32 %s131, 1
      %s133 = scalar_select %p130, %s131, %s132
      %p136 = pneg %p130
      %p137 = scmp.eq.s32.totalorder %s11, 1
      %p138 = por %p136, %p137
      %p139 = scmp.ne.s32.totalorder %s131, %s134
      %p140 = scmp.eq.s32.totalorder %s11, 0
      %p141 = por %p139, %p140
      %p142 = scmp.ne.s32.totalorder %s131, %s134
      %p143 = scmp.eq.s32.totalorder %s16, 1
      %p144 = por %p142, %p143
      %p145 = scmp.ne.s32.totalorder %s134, %s135
      %p146 = scmp.eq.s32.totalorder %s16, 0
      %p147 = por %p145, %p146
      %p148 = scmp.ne.s32.totalorder %s134, %s135
      %p149 = scmp.eq.s32.totalorder %s17, 1
      %p150 = por %p148, %p149
      %p152 = scmp.ne.s32.totalorder %s135, %s151
      %p153 = scmp.eq.s32.totalorder %s17, 0
      %p154 = por %p152, %p153
      %p155 = scmp.le.s32.totalorder 1, %s11
      %p156 = scmp.lt.s32.totalorder %s11, 3
      %p157 = pnand %p155, %p156
      %p158 = pneg %p157
      // Predicated region
      $region9: #{tpu_custom_call.1} parent=5 // pred_check
        _
      $region10: #{tpu_custom_call.1} parent=5 // pred_check_branch
        %160 = sbr.rel (%p157) target = $region12
      $region11: #{tpu_custom_call.1} parent=5 // pred_region
        %s161 = ssub.s32 %s11, 1
        // Predicated region
        $region13: #{tpu_custom_call.1} parent=11 // pred_check
          %p162 = pneg %p58
        $region14: #{tpu_custom_call.1} parent=11 // pred_check_branch
          %164 = sbr.rel (%p162) target = $region16
        $region15: #{tpu_custom_call.1} parent=11 // pred_region
          _
        $region16: #{tpu_custom_call.1} parent=11 // pred_fallthru
          _
        // Predicated region
        $region17: #{tpu_custom_call.1} parent=11 // pred_check
          %p165 = pneg %p79
        $region18: #{tpu_custom_call.1} parent=11 // pred_check_branch
          %167 = sbr.rel (%p165) target = $region20
        $region19: #{tpu_custom_call.1} parent=11 // pred_region
          _
        $region20: #{tpu_custom_call.1} parent=11 // pred_fallthru
          _
        // Predicated region
        $region21: #{tpu_custom_call.1} parent=11 // pred_check
          %p168 = pneg %p100
        $region22: #{tpu_custom_call.1} parent=11 // pred_check_branch
          %170 = sbr.rel (%p168) target = $region24
        $region23: #{tpu_custom_call.1} parent=11 // pred_region
          _
        $region24: #{tpu_custom_call.1} parent=11 // pred_fallthru
          _
        // Predicated region
        $region25: #{tpu_custom_call.1} parent=11 // pred_check
          %p171 = pneg %p121
        $region26: #{tpu_custom_call.1} parent=11 // pred_check_branch
          %173 = sbr.rel (%p171) target = $region28
        $region27: #{tpu_custom_call.1} parent=11 // pred_region
          _
        $region28: #{tpu_custom_call.1} parent=11 // pred_fallthru
          _
      $region12: #{tpu_custom_call.1} parent=5 // pred_fallthru
        _
      %p174 = scmp.lt.s32.totalorder %s11, 2
      // Predicated region
      $region29: #{tpu_custom_call.1} parent=5 // pred_check
        %p175 = pneg %p174
      $region30: #{tpu_custom_call.1} parent=5 // pred_check_branch
        %177 = sbr.rel (%p175) target = $region32
      $region31: #{tpu_custom_call.1} parent=5 // pred_region
        // Predicated region
        $region33: #{tpu_custom_call.1} parent=31 // pred_check
          %p178 = pneg %p31
        $region34: #{tpu_custom_call.1} parent=31 // pred_check_branch
          %180 = sbr.rel (%p178) target = $region36
        $region35: #{tpu_custom_call.1} parent=31 // pred_region
          %s181 = smul.u32 2, %s11
          %s182 = ssub.s32 3, %s181
          %p183 = scmp.lt.s32.totalorder %s182, 2
          %s184 = scalar_select %p183, %s182, 2
          %s185 = smul.u32 64, %s184
          %p186 = scmp.lt.s32.totalorder %s181, 2
          %s187 = scalar_select %p186, %s181, 2
          %s188 = smul.addr %s187, 4
          %s189 = scalar_lea.vmem %s0, %s188
          %s190 = smul.u32 2, %s11
          %s191 = ssub.s32 3, %s190
          %p192 = scmp.lt.s32.totalorder %s191, 2
          %s193 = scalar_select %p192, %s191, 2
          %s194 = smul.u32 64, %s193
        $region36: #{tpu_custom_call.1} parent=31 // pred_fallthru
          _
      $region32: #{tpu_custom_call.1} parent=5 // pred_fallthru
        _
      %p195 = scmp.le.s32.totalorder 1, %s11
      %p196 = scmp.lt.s32.totalorder %s11, 3
      %p197 = pnand %p195, %p196
      %p198 = pneg %p197
      // Predicated region
      $region37: #{tpu_custom_call.1} parent=5 // pred_check
        _
      $region38: #{tpu_custom_call.1} parent=5 // pred_check_branch
        %200 = sbr.rel (%p197) target = $region40
      $region39: #{tpu_custom_call.1} parent=5 // pred_region
        %s201 = ssub.s32 %s11, 1
        %s202 = smul.u32 2, %s16
        %s203 = ssub.s32 3, %s202
        %p204 = scmp.lt.s32.totalorder %s203, 2
        %s205 = scalar_select %p204, %s203, 2
        %s206 = smul.u32 64, %s205
        %p207 = scmp.lt.s32.totalorder %s202, 2
        %s208 = scalar_select %p207, %s202, 2
        %s209 = smul.addr %s208, 4
        %s210 = scalar_lea.vmem %s0, %s209
        %p211 = pneg %p37
        %p212 = pneg %p34
        %p213 = pneg %p58
        %p214 = pneg %p55
        %p215 = pneg %p79
        %p216 = pneg %p76
        %p217 = pneg %p100
        %p218 = pneg %p97
        %p219 = pneg %p121
        %p220 = pneg %p118
        %p221 = pneg %p147
        %p222 = pneg %p144
        %s223 = sand.u32 %s134, 1
        %s224 = sand.u32 %s134, 1
        %s225 = smul.addr %s224, 16
        %s226 = scalar_lea.vmem [#allocation2], %s225
        %s227 = smul.u32 2, %s16
        %s228 = ssub.s32 3, %s227
        %p229 = scmp.lt.s32.totalorder %s228, 2
        %s230 = scalar_select %p229, %s228, 2
        %s231 = smul.u32 64, %s230
        %p232 = scmp.lt.s32.totalorder %s227, 2
        %s233 = scalar_select %p232, %s227, 2
        %s234 = smul.addr %s233, 4
        %s235 = scalar_lea.vmem %s0, %s234
        %s236 = smul.u32 2, %s16
        %s237 = ssub.s32 3, %s236
        %p238 = scmp.lt.s32.totalorder %s237, 2
        %s239 = scalar_select %p238, %s237, 2
        %s240 = smul.u32 64, %s239
        %s241 = smul.u32 2, %s16
        %s242 = ssub.s32 3, %s241
        %p243 = scmp.lt.s32.totalorder %s242, 2
        %s244 = scalar_select %p243, %s242, 2
        %s245 = smul.u32 128, %s244
        %v247 = vld [vmem:[%s235] sm:$0xf]
        %v248 = vld [vmem:[%s235 + $0x4] sm:$0xf]
        %v249 = vld [vmem:[%s1] sm:$0xf]
        %v250 = vld [vmem:[%s1 + $0x4] sm:$0xf]
        %v251 = vld [vmem:[%s1 + $0x8] sm:$0xf]
        %v252 = vld [vmem:[%s1 + $0xc] sm:$0xf]
        %v253 = vld [vmem:[%s2] sm:$0x1]
        %v255 = vlaneseq
        %v256 = vshrl.u32 %v255, 7
        %v257 = vsub.s32 0, %v256
        %v258 = vrot.slane %v253, %v257
        %v262 = vunpack.c.l.b16 %v247
        %v263 = vunpack.c.l.b16 %v248
        %v264 = vpack.c.b16 %v263, %v262
        %v269 = vunpack.c.l.b16 %v249
        %v270 = vunpack.c.l.b16 %v250
        %v271 = vunpack.c.l.b16 %v251
        %v272 = vunpack.c.l.b16 %v252
        %v273 = vpack.c.b16 %v270, %v269
        %v274 = vpack.c.b16 %v272, %v271
        %vm277 = vcmask 261120
        %v279 = vsel %vm277, %v264, 0
        %281 = vmatprep.subr.bf16.mxu0 0
        %282 = vmatpush1.bf16.msra.mxu0 %v273
        %283 = vmatprep.subr.bf16.mxu0 0
        %284 = vmatpush1.bf16.msra.mxu0 %v274
        %285 = vmatprep.subr.bf16.mxu0 0
        %286 = vmatpush1.bf16.msra.mxu0 0
        %287 = vmatprep.subr.bf16.mxu0 0
        %288 = vmatpush1.bf16.msra.mxu0 0
        %289 = vmatprep.subr.bf16.mxu0 0
        %290 = vmatpush1.bf16.msra.mxu0 0
        %291 = vmatprep.subr.bf16.mxu0 0
        %292 = vmatpush1.bf16.msra.mxu0 0
        %293 = vmatprep.subr.bf16.mxu0 0
        %294 = vmatpush1.bf16.msra.mxu0 0
        %295 = vmatprep.subr.bf16.mxu0 0
        %296 = vmatpush1.bf16.msra.mxu0 0
        %297 = vmatprep.subr.bf16.mxu0 0
        %298 = vmatpush1.bf16.msra.mxu0 0
        %299 = vmatprep.subr.bf16.mxu0 0
        %300 = vmatpush1.bf16.msra.mxu0 0
        %301 = vmatprep.subr.bf16.mxu0 0
        %302 = vmatpush1.bf16.msra.mxu0 0
        %303 = vmatprep.subr.bf16.mxu0 0
        %304 = vmatpush1.bf16.msra.mxu0 0
        %305 = vmatprep.subr.bf16.mxu0 0
        %306 = vmatpush1.bf16.msra.mxu0 0
        %307 = vmatprep.subr.bf16.mxu0 0
        %308 = vmatpush1.bf16.msra.mxu0 0
        %309 = vmatprep.subr.bf16.mxu0 0
        %310 = vmatpush1.bf16.msra.mxu0 0
        %311 = vmatprep.subr.bf16.mxu0 0
        %312 = vmatpush1.bf16.msra.mxu0 0
        %313 = vmatprep.mubr.bf16.mxu0 0
        %314 = vmatmul.mubr.bf16.gmra.mrb[0].mxu0 %v279
        %v315 = vpop.f32.mrb[0].mxu0
        %v316 = vadd.f32 %v258, %v315
        %v317 = vpop.f32.mrb[0].mxu0
        %v318 = vpop.f32.mrb[0].mxu0
        %v319 = vadd.f32 %v258, %v318
        %v320 = vpop.f32.mrb[0].mxu0
        %321 = vdwg.mxu0
        %v322 = vmax.f32 %v316, 0.0
        %v323 = vmax.f32 %v319, 0.0
        %v324 = vpack.c.bf16 %v323, %v322
        %v325 = vld [vmem:[%s3] sm:$0xf]
        %v326 = vld [vmem:[%s3 + $0x4] sm:$0xf]
        %v327 = vld [vmem:[%s3 + $0x8] sm:$0xf]
        %v328 = vld [vmem:[%s3 + $0xc] sm:$0xf]
        %v329 = vld [vmem:[%s3 + $0x10] sm:$0xf]
        %v330 = vld [vmem:[%s3 + $0x14] sm:$0xf]
        %v331 = vld [vmem:[%s3 + $0x18] sm:$0xf]
        %v332 = vld [vmem:[%s3 + $0x1c] sm:$0xf]
        %v333 = vld [vmem:[%s3 + $0x20] sm:$0xf]
        %v334 = vld [vmem:[%s3 + $0x24] sm:$0xf]
        %v335 = vld [vmem:[%s3 + $0x28] sm:$0xf]
        %v336 = vld [vmem:[%s3 + $0x2c] sm:$0xf]
        %v337 = vld [vmem:[%s3 + $0x30] sm:$0xf]
        %v338 = vld [vmem:[%s3 + $0x34] sm:$0xf]
        %v339 = vld [vmem:[%s3 + $0x38] sm:$0xf]
        %v340 = vld [vmem:[%s3 + $0x3c] sm:$0xf]
        %v341 = vld [vmem:[%s4] sm:$0x1]
        %v343 = vlaneseq
        %v344 = vshrl.u32 %v343, 7
        %v345 = vsub.s32 0, %v344
        %v346 = vrot.slane %v341, %v345
        %v364 = vunpack.c.l.b16 %v325
        %v365 = vunpack.c.l.b16 %v326
        %v366 = vunpack.c.l.b16 %v327
        %v367 = vunpack.c.l.b16 %v328
        %v368 = vunpack.c.l.b16 %v329
        %v369 = vunpack.c.l.b16 %v330
        %v370 = vunpack.c.l.b16 %v331
        %v371 = vunpack.c.l.b16 %v332
        %v372 = vunpack.c.l.b16 %v333
        %v373 = vunpack.c.l.b16 %v334
        %v374 = vunpack.c.l.b16 %v335
        %v375 = vunpack.c.l.b16 %v336
        %v376 = vunpack.c.l.b16 %v337
        %v377 = vunpack.c.l.b16 %v338
        %v378 = vunpack.c.l.b16 %v339
        %v379 = vunpack.c.l.b16 %v340
        %v380 = vpack.c.b16 %v365, %v364
        %v381 = vpack.c.b16 %v367, %v366
        %v382 = vpack.c.b16 %v369, %v368
        %v383 = vpack.c.b16 %v371, %v370
        %v384 = vpack.c.b16 %v373, %v372
        %v385 = vpack.c.b16 %v375, %v374
        %v386 = vpack.c.b16 %v377, %v376
        %v387 = vpack.c.b16 %v379, %v378
        %396 = vmatprep.subr.bf16.mxu0 0
        %397 = vmatpush1.bf16.msra.mxu0 %v380
        %398 = vmatprep.subr.bf16.mxu0 0
        %399 = vmatpush1.bf16.msra.mxu0 %v381
        %400 = vmatprep.subr.bf16.mxu0 0
        %401 = vmatpush1.bf16.msra.mxu0 %v382
        %402 = vmatprep.subr.bf16.mxu0 0
        %403 = vmatpush1.bf16.msra.mxu0 %v383
        %404 = vmatprep.subr.bf16.mxu0 0
        %405 = vmatpush1.bf16.msra.mxu0 %v384
        %406 = vmatprep.subr.bf16.mxu0 0
        %407 = vmatpush1.bf16.msra.mxu0 %v385
        %408 = vmatprep.subr.bf16.mxu0 0
        %409 = vmatpush1.bf16.msra.mxu0 %v386
        %410 = vmatprep.subr.bf16.mxu0 0
        %411 = vmatpush1.bf16.msra.mxu0 %v387
        %412 = vmatprep.subr.bf16.mxu0 0
        %413 = vmatpush1.bf16.msra.mxu0 0
        %414 = vmatprep.subr.bf16.mxu0 0
        %415 = vmatpush1.bf16.msra.mxu0 0
        %416 = vmatprep.subr.bf16.mxu0 0
        %417 = vmatpush1.bf16.msra.mxu0 0
        %418 = vmatprep.subr.bf16.mxu0 0
        %419 = vmatpush1.bf16.msra.mxu0 0
        %420 = vmatprep.subr.bf16.mxu0 0
        %421 = vmatpush1.bf16.msra.mxu0 0
        %422 = vmatprep.subr.bf16.mxu0 0
        %423 = vmatpush1.bf16.msra.mxu0 0
        %424 = vmatprep.subr.bf16.mxu0 0
        %425 = vmatpush1.bf16.msra.mxu0 0
        %426 = vmatprep.subr.bf16.mxu0 0
        %427 = vmatpush1.bf16.msra.mxu0 0
        %428 = vmatprep.mubr.bf16.mxu0 0
        %429 = vmatmul.mubr.bf16.gmra.mrb[0].mxu0 %v324
        %v430 = vpop.f32.mrb[0].mxu0
        %v431 = vadd.f32 %v346, %v430
        %v432 = vpop.f32.mrb[0].mxu0
        %v433 = vpop.f32.mrb[0].mxu0
        %v434 = vadd.f32 %v346, %v433
        %v435 = vpop.f32.mrb[0].mxu0
        %436 = vdwg.mxu0
        %vm437 = vcmask 130048
        %438 = vst.msk [vmem:[%s226] sm:$0xff] %vm437, %v431
        %439 = vst.msk [vmem:[%s226 + $0x8] sm:$0xff] %vm437, %v434
        %s440 = sand.u32 %s134, 1
        %s441 = sand.u32 %s134, 1
        %s442 = smul.addr %s441, 16
        %s443 = scalar_lea.vmem [#allocation2], %s442
        // Predicated region
        $region41: #{tpu_custom_call.1} parent=39 // pred_check
          %p444 = pneg %p144
        $region42: #{tpu_custom_call.1} parent=39 // pred_check_branch
          %446 = sbr.rel (%p444) target = $region44
        $region43: #{tpu_custom_call.1} parent=39 // pred_region
          %s447 = smul.u32 2, %s16
          %s448 = ssub.s32 3, %s447
          %p449 = scmp.lt.s32.totalorder %s448, 2
          %s450 = scalar_select %p449, %s448, 2
          %s451 = smul.u32 128, %s450
          %p452 = scmp.ne.s32.totalorder 0, %s451
          %s453 = smul.addr %s447, 8
          %s454 = scalar_lea.vmem %s5, %s453
          // Predicated region
          $region45: #{tpu_custom_call.1} parent=43 // pred_check
            %p455 = pneg %p452
          $region46: #{tpu_custom_call.1} parent=43 // pred_check_branch
            %457 = sbr.rel (%p455) target = $region48
          $region47: #{tpu_custom_call.1} parent=43 // pred_region
            // Predicated region
            $region49: #{tpu_custom_call.1} parent=47 // pred_check
              _
            $region50: #{tpu_custom_call.1} parent=47 // pred_check_branch
              %459 = sbr.rel (0) target = $region52
            $region51: #{tpu_custom_call.1} parent=47 // pred_region
              // Predicated region
              $region71: #{tpu_custom_call.1} parent=51 // pred_check
                _
              $region72: #{tpu_custom_call.1} parent=51 // pred_check_branch
                %510 = sbr.rel (0) target = $region74
              $region73: #{tpu_custom_call.1} parent=51 // pred_region
                %s511 = sshrl.u32 %s450, 1
                // While loop
                $region75: #{tpu_custom_call.1} parent=73 // loop_pre_header
                  _
                $region76: #{tpu_custom_call.1} parent=73 // loop_header
                  %s513 = sphi 0, %s515
                  %p514 = scmp.ge.s32.totalorder %s513, %s511
                  %s518 = sphi 0, %s527
                  %s519 = sphi %s443, %s530
                  %s520 = sphi %s454, %s531
                $region77: #{tpu_custom_call.1} parent=73 // loop_header_branch
                  %517 = sbr.rel (%p514) target = $region81
                $region78: #{tpu_custom_call.1} parent=73 // loop_body
                  %v521 = vld [vmem:[%s519] sm:$0xff]
                  %522 = vst [vmem:[%s520] sm:$0xff] %v521
                  %v523 = vld [vmem:[%s519 + $0x8] sm:$0xff]
                  %524 = vst [vmem:[%s520 + $0x8] sm:$0xff] %v523
                  %s525 = sadd.s32 1, %s518
                  %p526 = scmp.ge.s32.totalorder %s525, %s511
                  %s527 = scalar_select %p526, 0, %s525
                  %s528 = smul.u32 %s527, 16
                  %s529 = smul.u32 %s527, 16
                  %s530 = scalar_lea.vmem %s443, %s528 [#allocation2]
                  %s531 = scalar_lea.vmem %s454, %s529
                $region79: #{tpu_custom_call.1} parent=73 // loop_footer
                  %s515 = sadd.s32 %s513, 1
                $region80: #{tpu_custom_call.1} parent=73 // loop_footer_branch
                  %512 = sbr.rel target = $region76
                $region81: #{tpu_custom_call.1} parent=73 // loop_exit
                  _
                %s532 = sshrl.u32 %s450, 1
                %s533 = sand.u32 %s450, 1
                %s534 = smul.u32 %s532, 2
                %s535 = smul.u32 8, %s534
                %s536 = scalar_lea.vmem %s443, %s535 [#allocation2]
                %s537 = smul.u32 8, %s534
                %s538 = scalar_lea.vmem %s454, %s537
                // While loop
                $region82: #{tpu_custom_call.1} parent=73 // loop_pre_header
                  _
                $region83: #{tpu_custom_call.1} parent=73 // loop_header
                  %s540 = sphi 0, %s542
                  %p541 = scmp.ge.s32.totalorder %s540, %s533
                  %s545 = sphi 0, %s552
                  %s546 = sphi %s536, %s555
                  %s547 = sphi %s538, %s556
                $region84: #{tpu_custom_call.1} parent=73 // loop_header_branch
                  %544 = sbr.rel (%p541) target = $region88
                $region85: #{tpu_custom_call.1} parent=73 // loop_body
                  %v548 = vld [vmem:[%s546] sm:$0xff]
                  %549 = vst [vmem:[%s547] sm:$0xff] %v548
                  %s550 = sadd.s32 1, %s545
                  %p551 = scmp.ge.s32.totalorder %s550, %s533
                  %s552 = scalar_select %p551, 0, %s550
                  %s553 = smul.u32 %s552, 8
                  %s554 = smul.u32 %s552, 8
                  %s555 = scalar_lea.vmem %s536, %s553 [#allocation2]
                  %s556 = scalar_lea.vmem %s538, %s554
                $region86: #{tpu_custom_call.1} parent=73 // loop_footer
                  %s542 = sadd.s32 %s540, 1
                $region87: #{tpu_custom_call.1} parent=73 // loop_footer_branch
                  %539 = sbr.rel target = $region83
                $region88: #{tpu_custom_call.1} parent=73 // loop_exit
                  _
              $region74: #{tpu_custom_call.1} parent=51 // pred_fallthru
                _
              // Predicated region
              $region89: #{tpu_custom_call.1} parent=51 // pred_check
                _
              $region90: #{tpu_custom_call.1} parent=51 // pred_check_branch
                %558 = sbr.rel target = $region92
              $region91: #{tpu_custom_call.1} parent=51 // pred_region
                _
              $region92: #{tpu_custom_call.1} parent=51 // pred_fallthru
                _
            $region52: #{tpu_custom_call.1} parent=47 // pred_fallthru
              _
            // Predicated region
            $region53: #{tpu_custom_call.1} parent=47 // pred_check
              _
            $region54: #{tpu_custom_call.1} parent=47 // pred_check_branch
              %461 = sbr.rel target = $region56
            $region55: #{tpu_custom_call.1} parent=47 // pred_region
              %s463 = sshrl.u32 %s450, 1
              // While loop
              $region57: #{tpu_custom_call.1} parent=55 // loop_pre_header
                _
              $region58: #{tpu_custom_call.1} parent=55 // loop_header
                %s465 = sphi 0, %s467
                %p466 = scmp.ge.s32.totalorder %s465, %s463
                %s470 = sphi 0, %s479
                %s471 = sphi %s443, %s482
                %s472 = sphi %s454, %s483
              $region59: #{tpu_custom_call.1} parent=55 // loop_header_branch
                %469 = sbr.rel (%p466) target = $region63
              $region60: #{tpu_custom_call.1} parent=55 // loop_body
                %v473 = vld [vmem:[%s471] sm:$0xff]
                %474 = vst [vmem:[%s472] sm:$0xff] %v473
                %v475 = vld [vmem:[%s471 + $0x8] sm:$0xff]
                %476 = vst [vmem:[%s472 + $0x8] sm:$0xff] %v475
                %s477 = sadd.s32 1, %s470
                %p478 = scmp.ge.s32.totalorder %s477, %s463
                %s479 = scalar_select %p478, 0, %s477
                %s480 = smul.u32 %s479, 16
                %s481 = smul.u32 %s479, 16
                %s482 = scalar_lea.vmem %s443, %s480 [#allocation2]
                %s483 = scalar_lea.vmem %s454, %s481
              $region61: #{tpu_custom_call.1} parent=55 // loop_footer
                %s467 = sadd.s32 %s465, 1
              $region62: #{tpu_custom_call.1} parent=55 // loop_footer_branch
                %464 = sbr.rel target = $region58
              $region63: #{tpu_custom_call.1} parent=55 // loop_exit
                _
              %s484 = sshrl.u32 %s450, 1
              %s485 = sand.u32 %s450, 1
              %s486 = smul.u32 %s484, 2
              %s487 = smul.u32 8, %s486
              %s488 = scalar_lea.vmem %s443, %s487 [#allocation2]
              %s489 = smul.u32 8, %s486
              %s490 = scalar_lea.vmem %s454, %s489
              // While loop
              $region64: #{tpu_custom_call.1} parent=55 // loop_pre_header
                _
              $region65: #{tpu_custom_call.1} parent=55 // loop_header
                %s492 = sphi 0, %s494
                %p493 = scmp.ge.s32.totalorder %s492, %s485
                %s497 = sphi 0, %s504
                %s498 = sphi %s488, %s507
                %s499 = sphi %s490, %s508
              $region66: #{tpu_custom_call.1} parent=55 // loop_header_branch
                %496 = sbr.rel (%p493) target = $region70
              $region67: #{tpu_custom_call.1} parent=55 // loop_body
                %v500 = vld [vmem:[%s498] sm:$0xff]
                %501 = vst [vmem:[%s499] sm:$0xff] %v500
                %s502 = sadd.s32 1, %s497
                %p503 = scmp.ge.s32.totalorder %s502, %s485
                %s504 = scalar_select %p503, 0, %s502
                %s505 = smul.u32 %s504, 8
                %s506 = smul.u32 %s504, 8
                %s507 = scalar_lea.vmem %s488, %s505 [#allocation2]
                %s508 = scalar_lea.vmem %s490, %s506
              $region68: #{tpu_custom_call.1} parent=55 // loop_footer
                %s494 = sadd.s32 %s492, 1
              $region69: #{tpu_custom_call.1} parent=55 // loop_footer_branch
                %491 = sbr.rel target = $region65
              $region70: #{tpu_custom_call.1} parent=55 // loop_exit
                _
            $region56: #{tpu_custom_call.1} parent=47 // pred_fallthru
              _
          $region48: #{tpu_custom_call.1} parent=43 // pred_fallthru
            _
          %559 = vnop
        $region44: #{tpu_custom_call.1} parent=39 // pred_fallthru
          _
      $region40: #{tpu_custom_call.1} parent=5 // pred_fallthru
        _
      %p560 = scmp.le.s32.totalorder 2, %s11
      // Predicated region
      $region93: #{tpu_custom_call.1} parent=5 // pred_check
        %p561 = pneg %p560
      $region94: #{tpu_custom_call.1} parent=5 // pred_check_branch
        %563 = sbr.rel (%p561) target = $region96
      $region95: #{tpu_custom_call.1} parent=5 // pred_region
        %s564 = ssub.s32 %s11, 2
        // Predicated region
        $region97: #{tpu_custom_call.1} parent=95 // pred_check
          %p565 = pneg %p150
        $region98: #{tpu_custom_call.1} parent=95 // pred_check_branch
          %567 = sbr.rel (%p565) target = $region100
        $region99: #{tpu_custom_call.1} parent=95 // pred_region
          %s568 = sand.u32 %s135, 1
          %s569 = sand.u32 %s135, 1
          %s570 = smul.addr %s569, 16
          %s571 = scalar_lea.vmem [#allocation2], %s570
        $region100: #{tpu_custom_call.1} parent=95 // pred_fallthru
          _
      $region96: #{tpu_custom_call.1} parent=5 // pred_fallthru
        _
    $region6: #{tpu_custom_call.1} parent=1 // loop_footer
      %s15 = sadd.s32 1, %s11
    $region7: #{tpu_custom_call.1} parent=1 // loop_footer_branch
      %10 = sbr.rel target = $region3
    $region8: #{tpu_custom_call.1} parent=1 // loop_exit
      _

</llo_original>
